<compile_context>
chip_gen: v5e
topology: v5e:2x2
jax: 0.10.0
libtpu: 0.0.40
codegen_flags: <defaults>
</compile_context>

<pallas_src>
import jax
import jax.numpy as jnp
from jax.experimental import pallas as pl
from jax.experimental.pallas import tpu as pltpu


# ----------------------------------------------------------------------------
# Forward pass: exact semantics of the reference module.
# ----------------------------------------------------------------------------
def net_forward(x):
    """Mirror of Net.forward(x).

    The reference forward body is `pass`, so it returns None and performs no
    computation.  No Pallas work is launched here on purpose (per review).
    """
    # TODO(synk): reference forward() defines no computation; nothing to lower.
    del x
    return None


# ----------------------------------------------------------------------------
# Optional plumbing-validation kernel (NOT part of forward semantics).
# ----------------------------------------------------------------------------
def _identity_kernel(x_ref, o_ref):
    # Pure pass-through copy; exists only to validate the Pallas TPU path.
    o_ref[...] = x_ref[...]


_GRIDLESS_BYTES_LIMIT = 16 << 20  # gate the whole-array path (v7x VMEM safety)
_TILE_ROWS = 512                  # lane-dense tile: (512, 128) f32 = 256 KiB


def _identity_pallas(x2d):
    """Minimal-overhead identity copy of a lane-dense 2-D slab.

    Small slabs use a gridless whole-array VMEM block with the input aliased to
    the output.  Larger slabs use (T, 128) tiles over a parallel 1-D grid so the
    pipeline's double buffers fit v7x's 64 MiB VMEM / 32 MiB scoped default.
    """
    rows, cols = x2d.shape
    if x2d.nbytes <= _GRIDLESS_BYTES_LIMIT:
        return pl.pallas_call(
            _identity_kernel,
            out_shape=jax.ShapeDtypeStruct(x2d.shape, x2d.dtype),
            in_specs=[pl.BlockSpec(memory_space=pltpu.MemorySpace.VMEM)],
            out_specs=pl.BlockSpec(memory_space=pltpu.MemorySpace.VMEM),
            input_output_aliases={0: 0},
        )(x2d)

    # Tiled path for large validation arrays (v7x-safe, near HBM roofline).
    tile_rows = min(_TILE_ROWS, rows)
    grid = (pl.cdiv(rows, tile_rows),)
    return pl.pallas_call(
        _identity_kernel,
        out_shape=jax.ShapeDtypeStruct(x2d.shape, x2d.dtype),
        grid=grid,
        in_specs=[pl.BlockSpec((tile_rows, cols), lambda i: (i, 0))],
        out_specs=pl.BlockSpec((tile_rows, cols), lambda i: (i, 0)),
        input_output_aliases={0: 0},
        compiler_params=pltpu.CompilerParams(
            dimension_semantics=("parallel",),   # shards across v7x's 2 TCs
            vmem_limit_bytes=64 << 20,           # room for double-buffered tiles
        ),
    )(x2d)


def _lane_dense_2d(x):
    """Flatten to a lane-dense 2-D slab whose last dim is a multiple of 128.

    Returns (slab, valid_elements).  If the element count is not a multiple of
    128 the flat vector is zero-padded so stores stay unmasked (no vst.msk);
    callers slice back the first `valid_elements` entries.  The reshape always
    materializes a fresh buffer, keeping the array donatable for the aliased
    identity call.
    """
    total = x.size
    flat = x.reshape(-1)
    if total % 128 != 0:
        pad = 128 - (total % 128)
        flat = jnp.concatenate([flat, jnp.zeros((pad,), dtype=x.dtype)])
    return flat.reshape(flat.size // 128, 128), total


if __name__ == "__main__":
    key = jax.random.PRNGKey(0)
    # Small NCHW input consistent with a conv-style module: [B, C, H, W].
    x = jax.random.normal(key, (2, 4, 16, 16), dtype=jnp.float32)

    # Forward pass — matches the reference module exactly (returns None, no work).
    out = net_forward(x)
    assert out is None

    # Plumbing validation: run the identity kernel once and block on its result.
    x2d, n_valid = _lane_dense_2d(x)           # (16, 128) for this demo shape
    y2d = jax.block_until_ready(_identity_pallas(x2d))
    # x2d was donated to the aliased output; only use y2d from here on.
    assert y2d.shape[1] == 128 and y2d.dtype == x.dtype
    y = y2d.reshape(-1)[:n_valid].reshape(x.shape)
    assert bool(jnp.array_equal(y, x))

    print("KERNEL_OK")
</pallas_src>

<mosaic_0001>
module attributes {stable_mosaic.version = 11 : i64} {
  func.func @_identity_kernel(%arg0: memref<16x128xf32, #tpu.memory_space<vmem>>, %arg1: memref<16x128xf32, #tpu.memory_space<vmem>>) attributes {dimension_semantics = [], scalar_prefetch = 0 : i64, scratch_operands = 0 : i64, tpu.core_type = #tpu.core_type<tc>} {
    %c0 = arith.constant 0 : index
    %c0_0 = arith.constant 0 : index
    %0 = vector.load %arg0[%c0, %c0_0] : memref<16x128xf32, #tpu.memory_space<vmem>>, vector<16x128xf32>
    %c0_1 = arith.constant 0 : index
    %c0_2 = arith.constant 0 : index
    %1 = vector.load %arg1[%c0_1, %c0_2] : memref<16x128xf32, #tpu.memory_space<vmem>>, vector<16x128xf32>
    tpu.vector_store %arg1[%c0_1, %c0_2], %0 {strides = array<i32>} : memref<16x128xf32, #tpu.memory_space<vmem>>, vector<16x128xf32>,
    return
  }
}

</mosaic_0001>

<llo_original>
// kernel: tpu_custom_call.1
$region0: #{tpu_custom_call.1}
  #allocation0 [shape = 'u32[]', space=smem, size = 0x4, offset = 0x4, fixed_abs, tag = 'smem constant byte address 0x4 - core index']
  #allocation1 [shape = 'u32[72,128]{1,0:T(1,128)}', space=vmem, size = 0x9000, scoped, tag = 'internal scratch']
  %s0 = inlined_call_operand.hbm [shape: f32[16,128], index: 0, kind: input, shape index: {}, may-alias: {0,1}]
  %s1 = inlined_call_operand.hbm [shape: f32[16,128], index: 1, kind: output, shape index: {}, may-alias: {0,1}]
  %s2 = sld [smem:[#allocation0]]
  $region18: #{tpu_custom_call.1} parent=0
    _
  %s4 = ssub.s32 1, %s2
  %s5 = scalar_select 0, %s4, %s2
  $region1: #{tpu_custom_call.1} parent=0
    #allocation2 [shape = 'u8[8192]{0}', space=vmem, size = 0x2000, scoped, tag = 'input window, operand 0, single buffered']
    #allocation3 [shape = 's32[1]{0}', space=sflag, size = 0x4, scoped, tag = 'scoped memory for tpu_custom_call.1']
    #allocation4 [shape = 's32[1]{0}', space=sflag, size = 0x4, scoped, tag = 'scoped memory for tpu_custom_call.1']
    #allocation5 [shape = 'u8[8192]{0}', space=vmem, size = 0x2000, scoped, tag = 'output window, operand 0, single buffered']
    %6 = vsyncpa [#allocation3], 0
    %7 = vsyncpa [#allocation4], 0
    // Predicated region
    $region2: #{tpu_custom_call.1} parent=1 // pred_check
      _
    $region3: #{tpu_custom_call.1} parent=1 // pred_check_branch
      %9 = sbr.rel (0) target = $region5
    $region4: #{tpu_custom_call.1} parent=1 // pred_region
      %11 = vsyncadd [#allocation3], 0
      %s12 = sshll.u32 %s0, 4
      %s13 = int_to_ptr.hbm [resolvable:$true] %s12
      %s14 = sshll.u32 [#allocation2], 4
      %s15 = int_to_ptr.vmem [resolvable:$true] %s14
      %20 = dma.hbm_to_vmem [thread:$0]  %s13, 256, %s15, [#allocation3], 128, 128, 8
    $region5: #{tpu_custom_call.1} parent=1 // pred_fallthru
      _
    // Predicated region
    $region6: #{tpu_custom_call.1} parent=1 // pred_check
      _
    $region7: #{tpu_custom_call.1} parent=1 // pred_check_branch
      %22 = sbr.rel (0) target = $region9
    $region8: #{tpu_custom_call.1} parent=1 // pred_region
      %24 = dma.done [#allocation3], 256
    $region9: #{tpu_custom_call.1} parent=1 // pred_fallthru
      _
    %v25 = vld [vmem:[#allocation2] sm:$0xff]
    %v26 = vld [vmem:[#allocation2 + $0x8] sm:$0xff]
    %27 = vst [vmem:[#allocation5] sm:$0xff] %v25
    %28 = vst [vmem:[#allocation5 + $0x8] sm:$0xff] %v26
    // Predicated region
    $region10: #{tpu_custom_call.1} parent=1 // pred_check
      _
    $region11: #{tpu_custom_call.1} parent=1 // pred_check_branch
      %30 = sbr.rel (0) target = $region13
    $region12: #{tpu_custom_call.1} parent=1 // pred_region
      %32 = vsyncadd [#allocation4], 0
      %s33 = sshll.u32 [#allocation5], 4
      %s34 = int_to_ptr.vmem [resolvable:$true] %s33
      %s35 = sshll.u32 %s1, 4
      %s36 = int_to_ptr.hbm [resolvable:$true] %s35
      %41 = dma.vmem_to_hbm [thread:$0]  %s34, 256, %s36, [#allocation4], 128, 128, 8
    $region13: #{tpu_custom_call.1} parent=1 // pred_fallthru
      _
    // Predicated region
    $region14: #{tpu_custom_call.1} parent=1 // pred_check
      _
    $region15: #{tpu_custom_call.1} parent=1 // pred_check_branch
      %43 = sbr.rel (0) target = $region17
    $region16: #{tpu_custom_call.1} parent=1 // pred_region
      %45 = dma.done [#allocation4], 256
    $region17: #{tpu_custom_call.1} parent=1 // pred_fallthru
      _
    %46 = vsyncpa [#allocation3], 1
    %47 = vsyncpa [#allocation4], 1

</llo_original>
